<compile_context>
chip_gen: v7x
topology: tpu7x:2x2x1
jax: 0.10.0
libtpu: 0.0.40
codegen_flags: <defaults>
</compile_context>

<pallas_src>
import functools
import math

import numpy as np
import jax
import jax.numpy as jnp
from jax.experimental import pallas as pl
from jax.experimental.pallas import tpu as pltpu

_MIB = 1024 * 1024


def _round_up(v, m):
    return ((v + m - 1) // m) * m


def _round_down(v, m):
    return (v // m) * m


# ---------------------------------------------------------------------------
# Activations
# ---------------------------------------------------------------------------
def _activation_jnp(x, activation, activation_scale):
    """Plain-JAX activation (no-weight branch and the reference)."""
    if activation == "identity":
        return x
    if activation == "tanh":
        return activation_scale * jnp.tanh(x / activation_scale)
    if activation == "logsigmoid":
        return jnp.exp(activation_scale * jax.nn.log_sigmoid(x))
    raise ValueError("Bad source activation")


def _activation_in_kernel(acc, activation, activation_scale, approx_recip):
    """f32 activation inside the kernel (VPU/EUP friendly on v5e/v6e/v7x)."""
    if activation == "identity":
        return acc
    if activation == "tanh":
        return activation_scale * jnp.tanh(acc * (1.0 / float(activation_scale)))
    if activation == "logsigmoid":
        # exp(scale * logsigmoid(x)) == sigmoid(x) ** scale
        if float(activation_scale) == 1.0:
            denom = 1.0 + jnp.exp(-acc)          # one EUP exp
            if approx_recip:
                return pl.reciprocal(denom, approx=True)   # near-free for bf16 outputs
            return 1.0 / denom                   # exact path for f32 consumers
        return jnp.exp(activation_scale * (-jnp.logaddexp(0.0, -acc)))  # stable general path
    raise ValueError("Bad source activation")


# ---------------------------------------------------------------------------
# Kernel
# ---------------------------------------------------------------------------
def _source_kernel(x_ref, w_ref, b_ref, o_ref, *, activation, activation_scale,
                   compute_dtype, approx_recip):
    # x_ref: (tile_n, K_in), w_ref: (K_in, tile_m), b_ref: (1, tile_m),
    # o_ref: (tile_n, tile_m)
    x = x_ref[...]
    if compute_dtype is not None and x.dtype != compute_dtype:
        x = x.astype(compute_dtype)          # in-register cast; weight pre-cast by wrapper
    acc = jnp.dot(x, w_ref[...], preferred_element_type=jnp.float32)   # f32 accumulate
    acc = acc + b_ref[...]                   # bias kept f32
    y = _activation_in_kernel(acc, activation, activation_scale, approx_recip)
    o_ref[...] = y.astype(o_ref.dtype)


# ---------------------------------------------------------------------------
# VMEM budgeting / tiling
# ---------------------------------------------------------------------------
def _vmem_physical_bytes():
    try:
        info = pltpu.get_tpu_info()
        cap = getattr(info, "vmem_capacity_bytes", None)
        if cap:
            return int(cap)
    except Exception:
        pass
    return 64 * _MIB   # conservative fallback = v7x per-TensorCore VMEM


def _choose_tiles(N, K_in, M_lanes, x_itemsize, w_itemsize, out_itemsize, budget):
    """Pick (tile_n, tile_m) so that ALL buffers (double-buffered x/out tiles,
    double-buffered weight/bias blocks) fit the VMEM budget."""
    # tile_m: keep the full lane dim resident if its double-buffered weight block
    # fits half the budget; otherwise the largest 128-multiple that does.
    full_w = 2 * K_in * M_lanes * w_itemsize
    if M_lanes <= 128 or full_w <= budget // 2:
        tile_m = M_lanes
    else:
        by_w = (budget // 2) // max(2 * K_in * w_itemsize, 1)
        tile_m = max(128, _round_down(by_w, 128))
        tile_m = min(tile_m, M_lanes)

    fixed = 2 * K_in * tile_m * w_itemsize + 2 * tile_m * 4     # weight + bias blocks
    rem = max(budget - fixed, 0)
    per_row = 2 * (K_in * x_itemsize + tile_m * out_itemsize)   # double-buffered x/out
    tn_budget = rem // max(per_row, 1)

    tn = min(tn_budget, 2048, N)
    if tn >= N:
        tile_n = N                                   # full dim -> always legal
    else:
        tile_n = _round_down(tn, 256)                # MXU-aligned (v6e/v7x; 2x128 on v5e)
        if tile_n == 0:
            tile_n = _round_down(tn, 128)
        if tile_n == 0:
            tile_n = max(8, _round_down(tn, 8))
        tile_n = min(tile_n, N)
    return tile_n, tile_m


# ---------------------------------------------------------------------------
# One-time (cacheable) parameter folding
# ---------------------------------------------------------------------------
def prepare_source_layer_params(weight, bias, *, num_heads, sub_heads, JT, JK, JV,
                                input_dim, compute_dtype=jnp.bfloat16,
                                pad_output_lanes=None):
    """Fold the per-sub-head weight into a block-diagonal GEMM operand.
    Call once per parameter update (NOT per forward) and reuse the result."""
    S = sub_heads
    D = input_dim // S
    Hps = num_heads // S
    JTKV = JT * JK * JV
    M_out = num_heads * JTKV

    if pad_output_lanes is None:
        # Pad the lane dim to a multiple of 128 only when the extra writeback
        # bytes are modest (<= 25%); otherwise masked stores cost less than 4x bytes.
        m128 = _round_up(M_out, 128)
        pad_output_lanes = (m128 != M_out) and ((m128 - M_out) * 4 <= M_out)
    M_lanes = _round_up(M_out, 128) if pad_output_lanes else M_out

    # W_bd[s*D + d, (h*S + s)*JTKV + m] = weight[h, s, i, j, k, d] (zeros elsewhere).
    # Built with a scatter (zeros + .at[].set), not an einsum with an identity matrix.
    w_perm = jnp.transpose(weight, (1, 5, 0, 2, 3, 4)).reshape(S, D, Hps, JTKV)
    w_bd = jnp.zeros((S, D, Hps, S, JTKV), dtype=weight.dtype)
    sidx = jnp.arange(S)
    w_bd = w_bd.at[sidx, :, :, sidx, :].set(w_perm)
    w_k = w_bd.reshape(input_dim, M_out)
    b_k = bias.reshape(1, M_out).astype(jnp.float32)

    if M_lanes != M_out:
        w_k = jnp.pad(w_k, ((0, 0), (0, M_lanes - M_out)))
        b_k = jnp.pad(b_k, ((0, 0), (0, M_lanes - M_out)))
    if compute_dtype is not None:
        w_k = w_k.astype(compute_dtype)      # cast once; kernel never re-casts weights

    return {"w_k": w_k, "b_k": b_k, "M_out": M_out, "M_lanes": M_lanes,
            "compute_dtype": compute_dtype}


# ---------------------------------------------------------------------------
# Forward wrapper
# ---------------------------------------------------------------------------
def source_layer_forward(
    x,
    weight,          # [num_heads//sub_heads, sub_heads, JT, JK, JV, input_dim//sub_heads] or None
    bias,            # [num_heads, JT, JK, JV]
    *,
    num_heads,
    sub_heads,
    JT,
    JK,
    JV,
    input_dim,
    activation="identity",
    activation_scale=1.0,
    compute_dtype=jnp.bfloat16,   # MXU operand dtype (None -> keep input dtype)
    out_dtype=None,               # output dtype (None -> x.dtype)
    prepared=None,                # result of prepare_source_layer_params (cached)
    tile_n=None,
    tile_m=None,
):
    batch_shape = x.shape[:-1]
    assert x.shape[-1] == input_dim
    out_dtype = x.dtype if out_dtype is None else jnp.dtype(out_dtype)

    if weight is None and prepared is None:
        # No-weight branch: bias tiled over batch dims + activation (pure broadcast).
        result = jnp.broadcast_to(bias, (*batch_shape, num_heads, JT, JK, JV))
        return _activation_jnp(result, activation, activation_scale).astype(out_dtype)

    if prepared is None:
        prepared = prepare_source_layer_params(
            weight, bias, num_heads=num_heads, sub_heads=sub_heads, JT=JT, JK=JK,
            JV=JV, input_dim=input_dim, compute_dtype=compute_dtype)

    w_k, b_k = prepared["w_k"], prepared["b_k"]
    M_out, M_lanes = prepared["M_out"], prepared["M_lanes"]
    compute_dtype = prepared["compute_dtype"]

    N = math.prod(batch_shape) if batch_shape else 1
    K_in = input_dim
    x_k = x.reshape(N, K_in)                 # x used as it lives in HBM (no transpose)

    # ---- VMEM-budgeted tiling (counts every buffer incl. double-buffering).
    budget = min(int(0.75 * _vmem_physical_bytes()), 96 * _MIB)
    auto_tn, auto_tm = _choose_tiles(
        N, K_in, M_lanes,
        x_itemsize=x.dtype.itemsize,
        w_itemsize=w_k.dtype.itemsize,
        out_itemsize=np.dtype(out_dtype).itemsize,
        budget=budget)
    tile_n = auto_tn if tile_n is None else min(tile_n, N)
    tile_m = auto_tm if tile_m is None else min(tile_m, M_lanes)
    grid_n = pl.cdiv(N, tile_n)
    grid_m = pl.cdiv(M_lanes, tile_m)

    # vmem_limit_bytes derived from the actual buffer sum (+ scratch headroom).
    vmem_need = (2 * tile_n * K_in * x.dtype.itemsize
                 + 2 * K_in * tile_m * w_k.dtype.itemsize
                 + 2 * tile_m * 4
                 + 2 * tile_n * tile_m * np.dtype(out_dtype).itemsize)
    vmem_limit = int(min(max(vmem_need + 8 * _MIB, 16 * _MIB), budget + 8 * _MIB))

    # ---- Advisory cost estimate: useful FLOPs only (exclude block-diagonal zeros).
    D = input_dim // sub_heads
    if activation == "identity":
        transc = 0
    elif activation == "tanh":
        transc = N * M_lanes
    else:  # logsigmoid
        transc = 2 * N * M_lanes
    cost = pl.CostEstimate(
        flops=2 * N * D * M_out,
        transcendentals=transc,
        bytes_accessed=(grid_m * N * K_in * x.dtype.itemsize      # x re-fetched per m block
                        + K_in * M_lanes * w_k.dtype.itemsize
                        + M_lanes * 4
                        + N * M_lanes * np.dtype(out_dtype).itemsize),
    )

    approx_recip = np.dtype(out_dtype).itemsize < 4   # approx reciprocal only for narrow outputs
    kernel = functools.partial(
        _source_kernel,
        activation=activation,
        activation_scale=activation_scale,
        compute_dtype=compute_dtype,
        approx_recip=approx_recip,
    )

    out_flat = pl.pallas_call(
        kernel,
        out_shape=jax.ShapeDtypeStruct((N, M_lanes), out_dtype),
        grid=(grid_m, grid_n),   # m outer: weight block stays resident across the N sweep
        in_specs=[
            pl.BlockSpec((tile_n, K_in), lambda m, n: (n, 0)),
            pl.BlockSpec((K_in, tile_m), lambda m, n: (0, m)),
            pl.BlockSpec((1, tile_m), lambda m, n: (0, m)),
        ],
        out_specs=pl.BlockSpec((tile_n, tile_m), lambda m, n: (n, m)),
        compiler_params=pltpu.CompilerParams(
            dimension_semantics=("parallel", "parallel"),
            vmem_limit_bytes=vmem_limit,
        ),
        cost_estimate=cost,
    )(x_k, w_k, b_k)

    if M_lanes != M_out:
        out_flat = out_flat[:, :M_out]
    # Output is already head-major (head = h*sub_heads + s): reshape is free.
    return out_flat.reshape(*batch_shape, num_heads, JT, JK, JV)


def make_source_layer(weight, bias, *, num_heads, sub_heads, JT, JK, JV, input_dim,
                      activation="identity", activation_scale=1.0,
                      compute_dtype=jnp.bfloat16, out_dtype=None):
    """Factory: folds/casts the weight once (outside the per-call path) and returns
    a forward(x) closure that reuses the prepared GEMM operands."""
    prepared = None
    if weight is not None:
        prepared = prepare_source_layer_params(
            weight, bias, num_heads=num_heads, sub_heads=sub_heads, JT=JT, JK=JK,
            JV=JV, input_dim=input_dim, compute_dtype=compute_dtype)

    def forward(x):
        return source_layer_forward(
            x, weight, bias, num_heads=num_heads, sub_heads=sub_heads, JT=JT,
            JK=JK, JV=JV, input_dim=input_dim, activation=activation,
            activation_scale=activation_scale, compute_dtype=compute_dtype,
            out_dtype=out_dtype, prepared=prepared)

    return forward


# ---------------------------------------------------------------------------
# Pure-JAX reference (mirrors the PyTorch forward)
# ---------------------------------------------------------------------------
def _reference_forward(x, weight, bias, *, num_heads, sub_heads, JT, JK, JV,
                       input_dim, activation, activation_scale):
    batch_shape = x.shape[:-1]
    xr = x.reshape(*batch_shape, sub_heads, input_dim // sub_heads)
    if weight is None:
        result = jnp.broadcast_to(bias, (*batch_shape, num_heads, JT, JK, JV))
    else:
        ein = jnp.einsum("hsijkd,...sd->...hsijk", weight, xr)
        result = bias + ein.reshape(*batch_shape, num_heads, JT, JK, JV)
    return _activation_jnp(result, activation, activation_scale)


if __name__ == "__main__":
    # Small config consistent with the module's shape requirements.
    num_heads = 4
    sub_heads = 2
    JT, JK, JV = 2, 2, 2
    input_dim = 32
    B, T = 2, 8  # x: (B, T, input_dim)

    key = jax.random.PRNGKey(0)
    kx, kw, kb = jax.random.split(key, 3)
    x = jax.random.normal(kx, (B, T, input_dim), dtype=jnp.float32)
    weight = 0.1 * jax.random.normal(
        kw,
        (num_heads // sub_heads, sub_heads, JT, JK, JV, input_dim // sub_heads),
        dtype=jnp.float32,
    )
    bias = 0.1 * jax.random.normal(kb, (num_heads, JT, JK, JV), dtype=jnp.float32)

    cfg = dict(num_heads=num_heads, sub_heads=sub_heads, JT=JT, JK=JK, JV=JV,
               input_dim=input_dim)

    # (activation, scale, compute_dtype, atol, rtol)
    checks = [
        ("identity", 1.0, jnp.bfloat16, 3e-2, 3e-2),
        ("tanh", 2.0, jnp.bfloat16, 3e-2, 3e-2),     # bf16 MXU operands (default path)
        ("tanh", 2.0, None, 1e-4, 1e-4),             # f32 operands
        ("logsigmoid", 1.0, None, 1e-4, 1e-4),       # sigmoid path (exact recip for f32 out)
        ("logsigmoid", 0.5, None, 1e-4, 1e-4),       # general logsigmoid path
    ]
    for activation, scale, cdt, atol, rtol in checks:
        fwd = make_source_layer(weight, bias, activation=activation,
                                activation_scale=scale, compute_dtype=cdt, **cfg)
        out = jax.block_until_ready(fwd(x))
        ref = jax.block_until_ready(_reference_forward(
            x, weight, bias, activation=activation, activation_scale=scale, **cfg))
        assert out.shape == (B, T, num_heads, JT, JK, JV), out.shape
        assert jnp.allclose(out.astype(jnp.float32), ref, atol=atol, rtol=rtol), (
            f"mismatch vs reference: activation={activation}, compute_dtype={cdt}"
        )

    # One-shot path (prepares the folded weight internally) for coverage.
    out = jax.block_until_ready(source_layer_forward(
        x, weight, bias, activation="tanh", activation_scale=2.0,
        compute_dtype=jnp.bfloat16, **cfg))
    ref = _reference_forward(x, weight, bias, activation="tanh",
                             activation_scale=2.0, **cfg)
    assert jnp.allclose(out.astype(jnp.float32), ref, atol=3e-2, rtol=3e-2)

    # No-weight branch (pure bias broadcast + activation, plain JAX).
    fwd0 = make_source_layer(None, bias, activation="tanh", activation_scale=2.0, **cfg)
    out0 = jax.block_until_ready(fwd0(x))
    ref0 = _reference_forward(x, None, bias, activation="tanh",
                              activation_scale=2.0, **cfg)
    assert out0.shape == (B, T, num_heads, JT, JK, JV)
    assert jnp.allclose(out0.astype(jnp.float32), ref0, atol=1e-5, rtol=1e-5)

    print("KERNEL_OK")
</pallas_src>

<mosaic_0001>
module attributes {stable_mosaic.version = 11 : i64} {
  func.func @_source_kernel(%arg0: i32, %arg1: i32, %arg2: memref<16x32xf32, #tpu.memory_space<vmem>>, %arg3: memref<32x32xbf16, #tpu.memory_space<vmem>>, %arg4: memref<1x32xf32, #tpu.memory_space<vmem>>, %arg5: memref<16x32xf32, #tpu.memory_space<vmem>>) attributes {dimension_semantics = [#tpu.dimension_semantics<parallel>, #tpu.dimension_semantics<parallel>], iteration_bounds = array<i64: 1, 1>, scalar_prefetch = 0 : i64, scratch_operands = 0 : i64, tpu.core_type = #tpu.core_type<tc>, window_params = [{transform_indices = @transform_0, window_bounds = array<i64: 16, 32>}, {transform_indices = @transform_1, window_bounds = array<i64: 32, 32>}, {transform_indices = @transform_2, window_bounds = array<i64: 1, 32>}, {transform_indices = @transform_3, window_bounds = array<i64: 16, 32>}]} {
    %c0 = arith.constant 0 : index
    %c0_0 = arith.constant 0 : index
    %0 = vector.load %arg2[%c0, %c0_0] : memref<16x32xf32, #tpu.memory_space<vmem>>, vector<16x32xf32>
    %1 = arith.truncf %0 : vector<16x32xf32> to vector<16x32xbf16>
    %c0_1 = arith.constant 0 : index
    %c0_2 = arith.constant 0 : index
    %2 = vector.load %arg3[%c0_1, %c0_2] : memref<32x32xbf16, #tpu.memory_space<vmem>>, vector<32x32xbf16>
    %cst = arith.constant dense<0.000000e+00> : vector<16x32xf32>
    %3 = tpu.matmul %1, %2, %cst {dimension_numbers = #tpu.dot_dimension_numbers<[1], [0], [0], [1], [0, 0, 1, 1], [], []>} : vector<16x32xbf16>, vector<32x32xbf16>, vector<16x32xf32> -> vector<16x32xf32>
    %c0_3 = arith.constant 0 : index
    %c0_4 = arith.constant 0 : index
    %4 = vector.load %arg4[%c0_3, %c0_4] : memref<1x32xf32, #tpu.memory_space<vmem>>, vector<1x32xf32>
    %5 = vector.broadcast %4 : vector<1x32xf32> to vector<16x32xf32>
    %6 = arith.addf %3, %5 : vector<16x32xf32>
    %c0_5 = arith.constant 0 : index
    %c0_6 = arith.constant 0 : index
    %7 = vector.load %arg5[%c0_5, %c0_6] : memref<16x32xf32, #tpu.memory_space<vmem>>, vector<16x32xf32>
    tpu.vector_store %arg5[%c0_5, %c0_6], %6 {strides = array<i32>} : memref<16x32xf32, #tpu.memory_space<vmem>>, vector<16x32xf32>,
    return
  }
  func.func @transform_0(%arg0: i32, %arg1: i32) -> (i32, i32) {
    %c0_i32 = arith.constant 0 : i32
    %c0_i32_0 = arith.constant 0 : i32
    return %arg1, %c0_i32 : i32, i32
  }
  func.func @transform_1(%arg0: i32, %arg1: i32) -> (i32, i32) {
    %c0_i32 = arith.constant 0 : i32
    %c0_i32_0 = arith.constant 0 : i32
    return %c0_i32, %arg0 : i32, i32
  }
  func.func @transform_2(%arg0: i32, %arg1: i32) -> (i32, i32) {
    %c0_i32 = arith.constant 0 : i32
    %c0_i32_0 = arith.constant 0 : i32
    return %c0_i32, %arg0 : i32, i32
  }
  func.func @transform_3(%arg0: i32, %arg1: i32) -> (i32, i32) {
    %c0_i32 = arith.constant 0 : i32
    return %arg1, %arg0 : i32, i32
  }
}

</mosaic_0001>

<llo_original>
// kernel: tpu_custom_call.1
$region0: #{tpu_custom_call.1}
  #allocation0 [shape = 'u32[]', space=smem, size = 0x4, offset = 0x4, fixed_abs, tag = 'smem constant byte address 0x4 - core index']
  #allocation1 [shape = 'u32[144,128]{1,0:T(1,128)}', space=vmem, size = 0x12000, scoped, tag = 'internal scratch']
  %s0 = inlined_call_operand.hbm [shape: f32[16,32], index: 0, kind: input, shape index: {}]
  %s1 = inlined_call_operand.hbm [shape: bf16[32,32], index: 1, kind: input, shape index: {}]
  %s2 = inlined_call_operand.vmem [shape: f32[1,32], index: 2, kind: input, shape index: {}]
  %s3 = inlined_call_operand.hbm [shape: f32[16,32], index: 3, kind: output, shape index: {}]
  %s4 = sld [smem:[#allocation0]]
  $region30: #{tpu_custom_call.1} parent=0
    _
  %s6 = ssub.s32 1, %s4
  %s7 = scalar_select 0, %s6, %s4
  $region1: #{tpu_custom_call.1} parent=0
    #allocation2 [shape = 'u8[8192]{0}', space=vmem, size = 0x2000, scoped, tag = 'input window, operand 0, single buffered']
    #allocation3 [shape = 's32[1]{0}', space=sflag, size = 0x4, scoped, tag = 'scoped memory for tpu_custom_call.1']
    #allocation4 [shape = 's32[1]{0}', space=sflag, size = 0x4, scoped, tag = 'scoped memory for tpu_custom_call.1']
    #allocation5 [shape = 'u8[8192]{0}', space=vmem, size = 0x2000, scoped, tag = 'input window, operand 1, single buffered']
    #allocation6 [shape = 's32[1]{0}', space=sflag, size = 0x4, scoped, tag = 'scoped memory for tpu_custom_call.1']
    #allocation7 [shape = 'u8[8192]{0}', space=vmem, size = 0x2000, scoped, tag = 'output window, operand 0, single buffered']
    %8 = vsyncpa [#allocation3], 0
    %9 = vsyncpa [#allocation6], 0
    %10 = vsyncpa [#allocation4], 0
    // Predicated region
    $region2: #{tpu_custom_call.1} parent=1 // pred_check
      _
    $region3: #{tpu_custom_call.1} parent=1 // pred_check_branch
      %12 = sbr.rel (0) target = $region5
    $region4: #{tpu_custom_call.1} parent=1 // pred_region
      %s14 = ssub.s32 256, 256
      %15 = vsyncadd [#allocation3], %s14
      %s16 = sshll.u32 [#allocation2], 4
      %s17 = int_to_ptr.vmem [resolvable:$true] %s16
      %22 = dma.hbm_to_vmem [thread:$0]  %s0, 256, %s17, [#allocation3], 128, 128, 8
    $region5: #{tpu_custom_call.1} parent=1 // pred_fallthru
      _
    // Predicated region
    $region6: #{tpu_custom_call.1} parent=1 // pred_check
      _
    $region7: #{tpu_custom_call.1} parent=1 // pred_check_branch
      %24 = sbr.rel (0) target = $region9
    $region8: #{tpu_custom_call.1} parent=1 // pred_region
      %s26 = ssub.s32 256, 256
      %27 = vsyncadd [#allocation6], %s26
      %s28 = sshll.u32 [#allocation5], 4
      %s29 = int_to_ptr.vmem [resolvable:$true] %s28
      %34 = dma.hbm_to_vmem [thread:$0]  %s1, 256, %s29, [#allocation6], 64, 64, 4
    $region9: #{tpu_custom_call.1} parent=1 // pred_fallthru
      _
    // Predicated region
    $region10: #{tpu_custom_call.1} parent=1 // pred_check
      _
    $region11: #{tpu_custom_call.1} parent=1 // pred_check_branch
      %36 = sbr.rel (0) target = $region13
    $region12: #{tpu_custom_call.1} parent=1 // pred_region
      _
    $region13: #{tpu_custom_call.1} parent=1 // pred_fallthru
      _
    // Predicated region
    $region14: #{tpu_custom_call.1} parent=1 // pred_check
      _
    $region15: #{tpu_custom_call.1} parent=1 // pred_check_branch
      %38 = sbr.rel (0) target = $region17
    $region16: #{tpu_custom_call.1} parent=1 // pred_region
      %39 = dma.done [#allocation3], 256
    $region17: #{tpu_custom_call.1} parent=1 // pred_fallthru
      _
    // Predicated region
    $region18: #{tpu_custom_call.1} parent=1 // pred_check
      _
    $region19: #{tpu_custom_call.1} parent=1 // pred_check_branch
      %41 = sbr.rel (0) target = $region21
    $region20: #{tpu_custom_call.1} parent=1 // pred_region
      %42 = dma.done [#allocation6], 256
    $region21: #{tpu_custom_call.1} parent=1 // pred_fallthru
      _
    %v44 = vld [vmem:[#allocation2] sm:$0xff]
    %v45 = vld [vmem:[#allocation2 + $0x8] sm:$0xff]
    %v46 = vpack.c.bf16 %v45, %v44
    %v47 = vld [vmem:[#allocation5] sm:$0xf]
    %v48 = vld [vmem:[#allocation5 + $0x4] sm:$0xf]
    %v49 = vld [vmem:[#allocation5 + $0x8] sm:$0xf]
    %v50 = vld [vmem:[#allocation5 + $0xc] sm:$0xf]
    %v51 = vld [vmem:[%s2] sm:$0x1]
    %v53 = vlaneseq
    %v54 = vshrl.u32 %v53, 7
    %v55 = vsub.s32 0, %v54
    %v56 = vrot.slane %v51, %v55
    %v62 = vunpack.c.l.b16 %v47
    %v63 = vunpack.c.l.b16 %v48
    %v64 = vunpack.c.l.b16 %v49
    %v65 = vunpack.c.l.b16 %v50
    %v66 = vpack.c.b16 %v63, %v62
    %v67 = vpack.c.b16 %v65, %v64
    %vm70 = vcmask 261120
    %v72 = vsel %vm70, %v46, 0
    %74 = vmatprep.subr.bf16.mxu0 0
    %75 = vmatpush1.bf16.msra.mxu0 %v66
    %76 = vmatprep.subr.bf16.mxu0 0
    %77 = vmatpush1.bf16.msra.mxu0 %v67
    %78 = vmatprep.subr.bf16.mxu0 0
    %79 = vmatpush1.bf16.msra.mxu0 0
    %80 = vmatprep.subr.bf16.mxu0 0
    %81 = vmatpush1.bf16.msra.mxu0 0
    %82 = vmatprep.subr.bf16.mxu0 0
    %83 = vmatpush1.bf16.msra.mxu0 0
    %84 = vmatprep.subr.bf16.mxu0 0
    %85 = vmatpush1.bf16.msra.mxu0 0
    %86 = vmatprep.subr.bf16.mxu0 0
    %87 = vmatpush1.bf16.msra.mxu0 0
    %88 = vmatprep.subr.bf16.mxu0 0
    %89 = vmatpush1.bf16.msra.mxu0 0
    %90 = vmatprep.subr.bf16.mxu0 0
    %91 = vmatpush1.bf16.msra.mxu0 0
    %92 = vmatprep.subr.bf16.mxu0 0
    %93 = vmatpush1.bf16.msra.mxu0 0
    %94 = vmatprep.subr.bf16.mxu0 0
    %95 = vmatpush1.bf16.msra.mxu0 0
    %96 = vmatprep.subr.bf16.mxu0 0
    %97 = vmatpush1.bf16.msra.mxu0 0
    %98 = vmatprep.subr.bf16.mxu0 0
    %99 = vmatpush1.bf16.msra.mxu0 0
    %100 = vmatprep.subr.bf16.mxu0 0
    %101 = vmatpush1.bf16.msra.mxu0 0
    %102 = vmatprep.subr.bf16.mxu0 0
    %103 = vmatpush1.bf16.msra.mxu0 0
    %104 = vmatprep.subr.bf16.mxu0 0
    %105 = vmatpush1.bf16.msra.mxu0 0
    %106 = vmatprep.mubr.bf16.mxu0 0
    %107 = vmatmul.mubr.bf16.gmra.mrb[0].mxu0 %v72
    %v108 = vpop.f32.mrb[0].mxu0
    %v109 = vadd.f32 %v56, %v108
    %v110 = vpop.f32.mrb[0].mxu0
    %v111 = vpop.f32.mrb[0].mxu0
    %v112 = vadd.f32 %v56, %v111
    %v113 = vpop.f32.mrb[0].mxu0
    %114 = vdwg.mxu0
    %115 = vst.msk [vmem:[#allocation7] sm:$0xff] %vm70, %v109
    %116 = vst.msk [vmem:[#allocation7 + $0x8] sm:$0xff] %vm70, %v112
    // Predicated region
    $region22: #{tpu_custom_call.1} parent=1 // pred_check
      _
    $region23: #{tpu_custom_call.1} parent=1 // pred_check_branch
      %118 = sbr.rel (0) target = $region25
    $region24: #{tpu_custom_call.1} parent=1 // pred_region
      %s120 = ssub.s32 256, 256
      %121 = vsyncadd [#allocation4], %s120
      %s122 = sshll.u32 [#allocation7], 4
      %s123 = int_to_ptr.vmem [resolvable:$true] %s122
      %128 = dma.vmem_to_hbm [thread:$0]  %s123, 256, %s3, [#allocation4], 128, 128, 8
    $region25: #{tpu_custom_call.1} parent=1 // pred_fallthru
      _
    // Predicated region
    $region26: #{tpu_custom_call.1} parent=1 // pred_check
      _
    $region27: #{tpu_custom_call.1} parent=1 // pred_check_branch
      %130 = sbr.rel (0) target = $region29
    $region28: #{tpu_custom_call.1} parent=1 // pred_region
      %131 = dma.done [#allocation4], 256
    $region29: #{tpu_custom_call.1} parent=1 // pred_fallthru
      _
    %132 = vsyncpa [#allocation3], 1
    %133 = vsyncpa [#allocation6], 1
    %134 = vsyncpa [#allocation4], 1

</llo_original>
